<compile_context>
chip_gen: v7x
topology: tpu7x:2x2x1
jax: 0.10.0
libtpu: 0.0.40
codegen_flags: <defaults>
</compile_context>

<pallas_src>
import jax
import jax.numpy as jnp
from jax.experimental import pallas as pl
from jax.experimental.pallas import tpu as pltpu


def _round_up(x, m):
    return ((x + m - 1) // m) * m


# ----------------------------------------------------------------------------- #
# Kernel: one timestep per grid index; state carried in VMEM scratch.
# ----------------------------------------------------------------------------- #
def _xlstm_seq_kernel(x_ref, state0_ref, w_ref, hseq_ref, final_ref, state_ref):
    # Shapes (all static):
    #   x_ref:      (1, B_pad, D_pad)      bf16   -- [x_t | 1 | pad]
    #   state0_ref: (4, B_pad, H_pad)      f32    -- [h0, c0, n0, m0]
    #   w_ref:      (K_pad, 4*H_pad)       bf16   -- [Wx ; b ; 0 ; Wh ; 0]
    #   hseq_ref:   (1, B_pad, H_pad)      f32    -- h_t output slab (lane dense)
    #   final_ref:  (4, B_pad, H_pad)      f32    -- [h_T, c_T, n_T, m_T]
    #   state_ref:  (4, B_pad, H_pad)      f32    -- carry scratch
    Hp = hseq_ref.shape[-1]
    t = pl.program_id(0)

    @pl.when(t == 0)
    def _():
        state_ref[...] = state0_ref[...]

    # Fused operand [x_t | 1 | h_{t-1}] in bf16 -> single MXU matmul.
    u = jnp.concatenate(
        [x_ref[0], state_ref[0].astype(jnp.bfloat16)], axis=-1)
    gates = jnp.dot(u, w_ref[...], preferred_element_type=jnp.float32)

    # 128-lane-aligned gate views (H_pad is a multiple of 128).
    i_pre = gates[:, 0 * Hp:1 * Hp]
    f_pre = gates[:, 1 * Hp:2 * Hp]
    z_pre = gates[:, 2 * Hp:3 * Hp]
    o_pre = gates[:, 3 * Hp:4 * Hp]

    c_prev = state_ref[1]
    n_prev = state_ref[2]
    m_prev = state_ref[3]

    # Exponential gating with log-domain stabilizer (all f32).
    m_new = jnp.maximum(f_pre + m_prev, i_pre)
    i_g = jnp.exp(i_pre - m_new)
    f_g = jnp.exp(f_pre + m_prev - m_new)
    z = jnp.tanh(z_pre)
    o = jax.nn.sigmoid(o_pre)

    c_new = f_g * c_prev + i_g * z
    n_new = f_g * n_prev + i_g

    # EUP approx reciprocal + one Newton step (~f32 accuracy; n_new > 0 always).
    r = pl.reciprocal(n_new, approx=True)
    r = r * (2.0 - n_new * r)
    h_new = o * (c_new * r)

    state_ref[0] = h_new
    state_ref[1] = c_new
    state_ref[2] = n_new
    state_ref[3] = m_new

    hseq_ref[0] = h_new

    @pl.when(t == pl.num_programs(0) - 1)
    def _():
        final_ref[...] = state_ref[...]


# ----------------------------------------------------------------------------- #
# Wrapper: pad / pack, run fused-sequence kernel, unpad.
# ----------------------------------------------------------------------------- #
def xlstm_sequence(xs, h0, c0, n0, m0, Wx, Wh, b):
    """Run the xLSTM (sLSTM) cell over a sequence.

    xs: (T, B, D); h0/c0/n0/m0: (B, H); Wx: (D, 4H); Wh: (H, 4H); b: (4H,)
    Returns (hs (T,B,H), (h_T, c_T, n_T, m_T)).
    """
    T, B, D = xs.shape
    H = h0.shape[-1]

    B_pad = _round_up(B, 8)              # sublane alignment (f32)
    H_pad = _round_up(H, 128)            # lane alignment for gate slices/outputs
    D_pad = _round_up(D + 1, 128)        # +1 for folded-bias ones column
    K_pad = D_pad + H_pad
    G = 4 * H_pad

    # --- Pack weights: [Wx ; b ; 0-pad ; Wh ; 0-pad], per-gate column padding,
    # gate order [i, f, z, o] preserved.  Cast to bf16 (MXU-native, halves the
    # resident-weight VMEM footprint).
    def _pad_gate_cols(W):               # (rows, 4H) -> (rows, 4*H_pad)
        r = W.shape[0]
        W4 = W.reshape(r, 4, H)
        W4 = jnp.pad(W4, ((0, 0), (0, 0), (0, H_pad - H)))
        return W4.reshape(r, G)

    W_cat = jnp.zeros((K_pad, G), jnp.float32)
    W_cat = W_cat.at[:D].set(_pad_gate_cols(Wx))
    W_cat = W_cat.at[D:D + 1].set(_pad_gate_cols(b.reshape(1, 4 * H)))
    W_cat = W_cat.at[D_pad:D_pad + H].set(_pad_gate_cols(Wh))
    W_cat = W_cat.astype(jnp.bfloat16)

    # --- Augment x with the constant-1 bias column, pad, cast to bf16.
    xs_aug = jnp.zeros((T, B_pad, D_pad), jnp.float32)
    xs_aug = xs_aug.at[:, :B, :D].set(xs)
    xs_aug = xs_aug.at[:, :, D].set(1.0)
    xs_aug = xs_aug.astype(jnp.bfloat16)

    # --- Packed initial state [h0, c0, n0, m0] (lane-dense slab).
    def _pad_state(s):
        return jnp.zeros((B_pad, H_pad), jnp.float32).at[:B, :H].set(s)

    state0 = jnp.stack(
        [_pad_state(h0), _pad_state(c0), _pad_state(n0), _pad_state(m0)])

    grid_spec = pltpu.PrefetchScalarGridSpec(
        num_scalar_prefetch=0,
        grid=(T,),
        in_specs=[
            pl.BlockSpec((1, B_pad, D_pad), lambda t: (t, 0, 0)),     # x_t
            pl.BlockSpec((4, B_pad, H_pad), lambda t: (0, 0, 0)),     # state0 (resident)
            pl.BlockSpec((K_pad, G), lambda t: (0, 0)),               # weights (resident)
        ],
        out_specs=[
            pl.BlockSpec((1, B_pad, H_pad), lambda t: (t, 0, 0)),     # h_t per step
            pl.BlockSpec((4, B_pad, H_pad), lambda t: (0, 0, 0)),     # final state
        ],
        scratch_shapes=[pltpu.VMEM((4, B_pad, H_pad), jnp.float32)],  # carry
    )

    hseq, final = pl.pallas_call(
        _xlstm_seq_kernel,
        out_shape=(
            jax.ShapeDtypeStruct((T, B_pad, H_pad), jnp.float32),
            jax.ShapeDtypeStruct((4, B_pad, H_pad), jnp.float32),
        ),
        grid_spec=grid_spec,
        compiler_params=pltpu.CompilerParams(
            dimension_semantics=("arbitrary",)),   # time is a true recurrence
    )(xs_aug, state0, W_cat)

    hs = hseq[:, :B, :H]
    hT = final[0, :B, :H]
    cT = final[1, :B, :H]
    nT = final[2, :B, :H]
    mT = final[3, :B, :H]
    return hs, (hT, cT, nT, mT)


def xlstm_cell(x, h_prev, c_prev, n_prev, m_prev, Wx, Wh, b):
    """Single xLSTM (sLSTM) cell step (T=1 special case). Returns (h, c, n, m)."""
    _, (h, c, n, m) = xlstm_sequence(x[None], h_prev, c_prev, n_prev, m_prev,
                                     Wx, Wh, b)
    return h, c, n, m


# ----------------------------------------------------------------------------- #
# Pure-JAX reference (same recurrence; same bf16 matmul-operand cast).
# ----------------------------------------------------------------------------- #
def _reference_scan(xs, h0, c0, n0, m0, Wx, Wh, b):
    Wcat = jnp.concatenate([Wx, b.reshape(1, -1), Wh], axis=0).astype(jnp.bfloat16)

    def step(carry, x):
        h, c, n, m = carry
        ones = jnp.ones((x.shape[0], 1), x.dtype)
        u = jnp.concatenate([x, ones, h], axis=-1).astype(jnp.bfloat16)
        gates = jnp.dot(u, Wcat, preferred_element_type=jnp.float32)
        i_pre, f_pre, z_pre, o_pre = jnp.split(gates, 4, axis=-1)
        m_new = jnp.maximum(f_pre + m, i_pre)
        i_g = jnp.exp(i_pre - m_new)
        f_g = jnp.exp(f_pre + m - m_new)
        z = jnp.tanh(z_pre)
        o = jax.nn.sigmoid(o_pre)
        c_new = f_g * c + i_g * z
        n_new = f_g * n + i_g
        h_new = o * c_new / n_new
        return (h_new, c_new, n_new, m_new), h_new

    (hT, cT, nT, mT), hs = jax.lax.scan(step, (h0, c0, n0, m0), xs)
    return hs, (hT, cT, nT, mT)


if __name__ == "__main__":
    T, B, D, H = 8, 2, 8, 32   # seq, batch, input_size, hidden_size

    key = jax.random.PRNGKey(0)
    kx, kh, kwx, kwh, kb = jax.random.split(key, 5)

    # Deterministic synthetic parameters (shapes implied by __init__).
    Wx = jax.random.normal(kwx, (D, 4 * H), jnp.float32) * 0.1
    Wh = jax.random.normal(kwh, (H, 4 * H), jnp.float32) * 0.1
    b = jax.random.normal(kb, (4 * H,), jnp.float32) * 0.1

    # Inputs and initial recurrent state.
    xs = jax.random.normal(kx, (T, B, D), jnp.float32)
    h0 = jax.random.normal(kh, (B, H), jnp.float32) * 0.1
    c0 = jnp.zeros((B, H), jnp.float32)
    n0 = jnp.zeros((B, H), jnp.float32)
    m0 = jnp.zeros((B, H), jnp.float32)

    # Fused-sequence kernel.
    hs, (hT, cT, nT, mT) = xlstm_sequence(xs, h0, c0, n0, m0, Wx, Wh, b)
    jax.block_until_ready((hs, hT, cT, nT, mT))

    # Single-step (cell) API.
    h1, c1, n1, m1 = xlstm_cell(xs[0], h0, c0, n0, m0, Wx, Wh, b)
    jax.block_until_ready((h1, c1, n1, m1))

    # Cross-check against pure-JAX references of the same recurrence.
    # Tolerance reflects bf16 quantization of the recurrent matmul operands
    # (both paths use bf16 operands with f32 accumulation) plus the EUP
    # approx-reciprocal + Newton step; state/gating math itself is f32.
    hs_r, (hT_r, cT_r, nT_r, mT_r) = _reference_scan(xs, h0, c0, n0, m0, Wx, Wh, b)
    tol = dict(atol=5e-3, rtol=5e-3)
    assert jnp.allclose(hs, hs_r, **tol)
    assert jnp.allclose(hT, hT_r, **tol)
    assert jnp.allclose(cT, cT_r, **tol)
    assert jnp.allclose(nT, nT_r, **tol)
    assert jnp.allclose(mT, mT_r, **tol)

    hs1_r, (h1_r, c1_r, n1_r, m1_r) = _reference_scan(xs[:1], h0, c0, n0, m0, Wx, Wh, b)
    assert jnp.allclose(h1, h1_r, **tol)
    assert jnp.allclose(c1, c1_r, **tol)
    assert jnp.allclose(n1, n1_r, **tol)
    assert jnp.allclose(m1, m1_r, **tol)

    # TODO(synk): the reference torch forward() is an empty stub; semantics here
    # follow the canonical xLSTM sLSTM cell implied by the class name/signature.
    print("KERNEL_OK")
</pallas_src>

<mosaic_0001>
module attributes {stable_mosaic.version = 11 : i64} {
  func.func @_xlstm_seq_kernel(%arg0: i32, %arg1: memref<1x8x128xbf16, #tpu.memory_space<vmem>>, %arg2: memref<4x8x128xf32, #tpu.memory_space<vmem>>, %arg3: memref<256x512xbf16, #tpu.memory_space<vmem>>, %arg4: memref<1x8x128xf32, #tpu.memory_space<vmem>>, %arg5: memref<4x8x128xf32, #tpu.memory_space<vmem>>, %arg6: memref<4x8x128xf32, #tpu.memory_space<vmem>>) attributes {dimension_semantics = [#tpu.dimension_semantics<arbitrary>], iteration_bounds = array<i64: 8>, scalar_prefetch = 0 : i64, scratch_operands = 1 : i64, tpu.core_type = #tpu.core_type<tc>, window_params = [{transform_indices = @transform_0, window_bounds = array<i64: 1, 8, 128>}, {pipeline_mode = #tpu.pipeline_mode<synchronous>, transform_indices = @transform_1, window_bounds = array<i64: 4, 8, 128>}, {pipeline_mode = #tpu.pipeline_mode<synchronous>, transform_indices = @transform_2, window_bounds = array<i64: 256, 512>}, {transform_indices = @transform_3, window_bounds = array<i64: 1, 8, 128>}, {pipeline_mode = #tpu.pipeline_mode<synchronous>, transform_indices = @transform_4, window_bounds = array<i64: 4, 8, 128>}]} {
    %c0_i32 = arith.constant 0 : i32
    %0 = arith.cmpi eq, %arg0, %c0_i32 : i32
    %1 = arith.extui %0 : i1 to i32
    %c0_i32_0 = arith.constant 0 : i32
    %2 = arith.cmpi ne, %1, %c0_i32_0 : i32
    scf.if %2 {
      %c0_32 = arith.constant 0 : index
      %c0_33 = arith.constant 0 : index
      %c0_34 = arith.constant 0 : index
      %64 = vector.load %arg2[%c0_32, %c0_33, %c0_34] : memref<4x8x128xf32, #tpu.memory_space<vmem>>, vector<4x8x128xf32>
      %c0_35 = arith.constant 0 : index
      %c0_36 = arith.constant 0 : index
      %c0_37 = arith.constant 0 : index
      %65 = vector.load %arg6[%c0_35, %c0_36, %c0_37] : memref<4x8x128xf32, #tpu.memory_space<vmem>>, vector<4x8x128xf32>
      tpu.vector_store %arg6[%c0_35, %c0_36, %c0_37], %64 {strides = array<i32>} : memref<4x8x128xf32, #tpu.memory_space<vmem>>, vector<4x8x128xf32>,
    } else {
    }
    %c0 = arith.constant 0 : index
    %c0_1 = arith.constant 0 : index
    %c0_2 = arith.constant 0 : index
    %3 = vector.load %arg1[%c0, %c0_1, %c0_2] : memref<1x8x128xbf16, #tpu.memory_space<vmem>>, vector<1x8x128xbf16>
    %4 = vector.shape_cast %3 : vector<1x8x128xbf16> to vector<8x128xbf16>
    %c0_3 = arith.constant 0 : index
    %c0_4 = arith.constant 0 : index
    %c0_5 = arith.constant 0 : index
    %5 = vector.load %arg6[%c0_3, %c0_4, %c0_5] : memref<4x8x128xf32, #tpu.memory_space<vmem>>, vector<1x8x128xf32>
    %6 = vector.shape_cast %5 : vector<1x8x128xf32> to vector<8x128xf32>
    %7 = arith.truncf %6 : vector<8x128xf32> to vector<8x128xbf16>
    %8 = tpu.concatenate %4, %7 in 1 : vector<8x128xbf16>, vector<8x128xbf16> -> vector<8x256xbf16>
    %c0_6 = arith.constant 0 : index
    %c0_7 = arith.constant 0 : index
    %9 = vector.load %arg3[%c0_6, %c0_7] : memref<256x512xbf16, #tpu.memory_space<vmem>>, vector<256x512xbf16>
    %cst = arith.constant dense<0.000000e+00> : vector<8x512xf32>
    %10 = tpu.matmul %8, %9, %cst {dimension_numbers = #tpu.dot_dimension_numbers<[1], [0], [0], [1], [0, 0, 1, 1], [], []>} : vector<8x256xbf16>, vector<256x512xbf16>, vector<8x512xf32> -> vector<8x512xf32>
    %11 = vector.extract_strided_slice %10 {offsets = [0, 0], sizes = [8, 128], strides = [1, 1]} : vector<8x512xf32> to vector<8x128xf32>
    %12 = vector.extract_strided_slice %10 {offsets = [0, 128], sizes = [8, 128], strides = [1, 1]} : vector<8x512xf32> to vector<8x128xf32>
    %13 = vector.extract_strided_slice %10 {offsets = [0, 256], sizes = [8, 128], strides = [1, 1]} : vector<8x512xf32> to vector<8x128xf32>
    %14 = vector.extract_strided_slice %10 {offsets = [0, 384], sizes = [8, 128], strides = [1, 1]} : vector<8x512xf32> to vector<8x128xf32>
    %c1 = arith.constant 1 : index
    %c0_8 = arith.constant 0 : index
    %c0_9 = arith.constant 0 : index
    %15 = vector.load %arg6[%c1, %c0_8, %c0_9] : memref<4x8x128xf32, #tpu.memory_space<vmem>>, vector<1x8x128xf32>
    %16 = vector.shape_cast %15 : vector<1x8x128xf32> to vector<8x128xf32>
    %c2 = arith.constant 2 : index
    %c0_10 = arith.constant 0 : index
    %c0_11 = arith.constant 0 : index
    %17 = vector.load %arg6[%c2, %c0_10, %c0_11] : memref<4x8x128xf32, #tpu.memory_space<vmem>>, vector<1x8x128xf32>
    %18 = vector.shape_cast %17 : vector<1x8x128xf32> to vector<8x128xf32>
    %c3 = arith.constant 3 : index
    %c0_12 = arith.constant 0 : index
    %c0_13 = arith.constant 0 : index
    %19 = vector.load %arg6[%c3, %c0_12, %c0_13] : memref<4x8x128xf32, #tpu.memory_space<vmem>>, vector<1x8x128xf32>
    %20 = vector.shape_cast %19 : vector<1x8x128xf32> to vector<8x128xf32>
    %21 = arith.addf %12, %20 : vector<8x128xf32>
    %22 = arith.maximumf %21, %11 : vector<8x128xf32>
    %23 = arith.subf %11, %22 : vector<8x128xf32>
    %24 = math.exp %23 : vector<8x128xf32>
    %25 = arith.addf %12, %20 : vector<8x128xf32>
    %26 = arith.subf %25, %22 : vector<8x128xf32>
    %27 = math.exp %26 : vector<8x128xf32>
    %28 = math.tanh %13 : vector<8x128xf32>
    %29 = arith.negf %14 : vector<8x128xf32>
    %30 = math.exp %29 : vector<8x128xf32>
    %cst_14 = arith.constant 1.000000e+00 : f32
    %31 = vector.broadcast %cst_14 : f32 to vector<8x128xf32>
    %32 = arith.addf %31, %30 : vector<8x128xf32>
    %33 = arith.divf %31, %32 : vector<8x128xf32>
    %34 = arith.mulf %27, %16 : vector<8x128xf32>
    %35 = arith.mulf %24, %28 : vector<8x128xf32>
    %36 = arith.addf %34, %35 : vector<8x128xf32>
    %37 = arith.mulf %27, %18 : vector<8x128xf32>
    %38 = arith.addf %37, %24 : vector<8x128xf32>
    %39 = tpu.reciprocal %38 {approx = true} : vector<8x128xf32> -> vector<8x128xf32>
    %40 = arith.mulf %38, %39 : vector<8x128xf32>
    %cst_15 = arith.constant 2.000000e+00 : f32
    %41 = vector.broadcast %cst_15 : f32 to vector<8x128xf32>
    %42 = arith.subf %41, %40 : vector<8x128xf32>
    %43 = arith.mulf %39, %42 : vector<8x128xf32>
    %44 = arith.mulf %36, %43 : vector<8x128xf32>
    %45 = arith.mulf %33, %44 : vector<8x128xf32>
    %c0_16 = arith.constant 0 : index
    %c0_17 = arith.constant 0 : index
    %c0_18 = arith.constant 0 : index
    %46 = vector.load %arg6[%c0_16, %c0_17, %c0_18] : memref<4x8x128xf32, #tpu.memory_space<vmem>>, vector<1x8x128xf32>
    %47 = vector.shape_cast %46 : vector<1x8x128xf32> to vector<8x128xf32>
    %48 = vector.shape_cast %45 : vector<8x128xf32> to vector<1x8x128xf32>
    tpu.vector_store %arg6[%c0_16, %c0_17, %c0_18], %48 {strides = array<i32>} : memref<4x8x128xf32, #tpu.memory_space<vmem>>, vector<1x8x128xf32>,
    %c1_19 = arith.constant 1 : index
    %c0_20 = arith.constant 0 : index
    %c0_21 = arith.constant 0 : index
    %49 = vector.load %arg6[%c1_19, %c0_20, %c0_21] : memref<4x8x128xf32, #tpu.memory_space<vmem>>, vector<1x8x128xf32>
    %50 = vector.shape_cast %49 : vector<1x8x128xf32> to vector<8x128xf32>
    %51 = vector.shape_cast %36 : vector<8x128xf32> to vector<1x8x128xf32>
    tpu.vector_store %arg6[%c1_19, %c0_20, %c0_21], %51 {strides = array<i32>} : memref<4x8x128xf32, #tpu.memory_space<vmem>>, vector<1x8x128xf32>,
    %c2_22 = arith.constant 2 : index
    %c0_23 = arith.constant 0 : index
    %c0_24 = arith.constant 0 : index
    %52 = vector.load %arg6[%c2_22, %c0_23, %c0_24] : memref<4x8x128xf32, #tpu.memory_space<vmem>>, vector<1x8x128xf32>
    %53 = vector.shape_cast %52 : vector<1x8x128xf32> to vector<8x128xf32>
    %54 = vector.shape_cast %38 : vector<8x128xf32> to vector<1x8x128xf32>
    tpu.vector_store %arg6[%c2_22, %c0_23, %c0_24], %54 {strides = array<i32>} : memref<4x8x128xf32, #tpu.memory_space<vmem>>, vector<1x8x128xf32>,
    %c3_25 = arith.constant 3 : index
    %c0_26 = arith.constant 0 : index
    %c0_27 = arith.constant 0 : index
    %55 = vector.load %arg6[%c3_25, %c0_26, %c0_27] : memref<4x8x128xf32, #tpu.memory_space<vmem>>, vector<1x8x128xf32>
    %56 = vector.shape_cast %55 : vector<1x8x128xf32> to vector<8x128xf32>
    %57 = vector.shape_cast %22 : vector<8x128xf32> to vector<1x8x128xf32>
    tpu.vector_store %arg6[%c3_25, %c0_26, %c0_27], %57 {strides = array<i32>} : memref<4x8x128xf32, #tpu.memory_space<vmem>>, vector<1x8x128xf32>,
    %c0_28 = arith.constant 0 : index
    %c0_29 = arith.constant 0 : index
    %c0_30 = arith.constant 0 : index
    %58 = vector.load %arg4[%c0_28, %c0_29, %c0_30] : memref<1x8x128xf32, #tpu.memory_space<vmem>>, vector<1x8x128xf32>
    %59 = vector.shape_cast %58 : vector<1x8x128xf32> to vector<8x128xf32>
    %60 = vector.shape_cast %45 : vector<8x128xf32> to vector<1x8x128xf32>
    tpu.vector_store %arg4[%c0_28, %c0_29, %c0_30], %60 {strides = array<i32>} : memref<1x8x128xf32, #tpu.memory_space<vmem>>, vector<1x8x128xf32>,
    %c7_i32 = arith.constant 7 : i32
    %61 = arith.cmpi eq, %arg0, %c7_i32 : i32
    %62 = arith.extui %61 : i1 to i32
    %c0_i32_31 = arith.constant 0 : i32
    %63 = arith.cmpi ne, %62, %c0_i32_31 : i32
    scf.if %63 {
      %c0_32 = arith.constant 0 : index
      %c0_33 = arith.constant 0 : index
      %c0_34 = arith.constant 0 : index
      %64 = vector.load %arg6[%c0_32, %c0_33, %c0_34] : memref<4x8x128xf32, #tpu.memory_space<vmem>>, vector<4x8x128xf32>
      %c0_35 = arith.constant 0 : index
      %c0_36 = arith.constant 0 : index
      %c0_37 = arith.constant 0 : index
      %65 = vector.load %arg5[%c0_35, %c0_36, %c0_37] : memref<4x8x128xf32, #tpu.memory_space<vmem>>, vector<4x8x128xf32>
      tpu.vector_store %arg5[%c0_35, %c0_36, %c0_37], %64 {strides = array<i32>} : memref<4x8x128xf32, #tpu.memory_space<vmem>>, vector<4x8x128xf32>,
    } else {
    }
    return
  }
  func.func @transform_0(%arg0: i32) -> (i32, i32, i32) {
    %c0_i32 = arith.constant 0 : i32
    %c0_i32_0 = arith.constant 0 : i32
    %c0_i32_1 = arith.constant 0 : i32
    return %arg0, %c0_i32, %c0_i32_0 : i32, i32, i32
  }
  func.func @transform_1(%arg0: i32) -> (i32, i32, i32) {
    %c0_i32 = arith.constant 0 : i32
    %c0_i32_0 = arith.constant 0 : i32
    %c0_i32_1 = arith.constant 0 : i32
    %c0_i32_2 = arith.constant 0 : i32
    return %c0_i32, %c0_i32_0, %c0_i32_1 : i32, i32, i32
  }
  func.func @transform_2(%arg0: i32) -> (i32, i32) {
    %c0_i32 = arith.constant 0 : i32
    %c0_i32_0 = arith.constant 0 : i32
    %c0_i32_1 = arith.constant 0 : i32
    return %c0_i32, %c0_i32_0 : i32, i32
  }
  func.func @transform_3(%arg0: i32) -> (i32, i32, i32) {
    %c0_i32 = arith.constant 0 : i32
    %c0_i32_0 = arith.constant 0 : i32
    %c0_i32_1 = arith.constant 0 : i32
    return %arg0, %c0_i32, %c0_i32_0 : i32, i32, i32
  }
  func.func @transform_4(%arg0: i32) -> (i32, i32, i32) {
    %c0_i32 = arith.constant 0 : i32
    %c0_i32_0 = arith.constant 0 : i32
    %c0_i32_1 = arith.constant 0 : i32
    %c0_i32_2 = arith.constant 0 : i32
    return %c0_i32, %c0_i32_0, %c0_i32_1 : i32, i32, i32
  }
}

</mosaic_0001>

<llo_original>
// kernel: tpu_custom_call.1
$region0: #{tpu_custom_call.1}
  #allocation0 [shape = 'u32[]', space=smem, size = 0x4, offset = 0x4, fixed_abs, tag = 'smem constant byte address 0x4 - core index']
  #allocation1 [shape = 'u32[144,128]{1,0:T(1,128)}', space=vmem, size = 0x12000, scoped, tag = 'internal scratch']
  #allocation2 [shape = 'f32[4,8,128]{2,1,0:T(8,128)}', space=vmem, size = 0x4000, scoped, tag = 'scratch operand']
  %s0 = inlined_call_operand.hbm [shape: bf16[8,8,128], index: 0, kind: input, shape index: {}]
  %s1 = inlined_call_operand.hbm [shape: f32[4,8,128], index: 1, kind: input, shape index: {}]
  %s2 = inlined_call_operand.hbm [shape: bf16[256,512], index: 2, kind: input, shape index: {}]
  %s3 = inlined_call_operand.hbm [shape: f32[8,8,128], index: 3, kind: output, shape index: {0}]
  %s4 = inlined_call_operand.hbm [shape: f32[4,8,128], index: 4, kind: output, shape index: {1}]
  %5 = xla_tuple %s3, %s4
  %s6 = sld [smem:[#allocation0]]
  $region73: #{tpu_custom_call.1} parent=0
    _
  %s8 = ssub.s32 1, %s6
  %s9 = scalar_select 0, %s8, %s6
  $region1: #{tpu_custom_call.1} parent=0
    #allocation3 [shape = 'u8[4096]{0}', space=vmem, size = 0x1000, scoped, tag = 'input window, operand 0']
    #allocation4 [shape = 's32[2]{0}', space=sflag, size = 0x8, scoped, tag = 'scoped memory for tpu_custom_call.1']
    #allocation5 [shape = 's32[2]{0}', space=sflag, size = 0x8, scoped, tag = 'scoped memory for tpu_custom_call.1']
    #allocation6 [shape = 'u8[16384]{0}', space=vmem, size = 0x4000, scoped, tag = 'input window, operand 1, single buffered']
    #allocation7 [shape = 's32[1]{0}', space=sflag, size = 0x4, scoped, tag = 'scoped memory for tpu_custom_call.1']
    #allocation8 [shape = 'u8[262144]{0}', space=vmem, size = 0x40000, scoped, tag = 'input window, operand 2, single buffered']
    #allocation9 [shape = 'u8[8192]{0}', space=vmem, size = 0x2000, scoped, tag = 'output window, operand 0']
    #allocation10 [shape = 'u8[16384]{0}', space=vmem, size = 0x4000, scoped, tag = 'output window, operand 1, single buffered']
    #allocation11 [shape = 's32[1]{0}', space=sflag, size = 0x4, scoped, tag = 'scoped memory for tpu_custom_call.1']
    %10 = vsyncpa [#allocation4], 0
    %s11 = scalar_lea.sflag [#allocation4], 1
    %12 = vsyncpa %s11, 0
    %13 = vsyncpa [#allocation7], 0
    %14 = vsyncpa [#allocation5], 0
    %s15 = scalar_lea.sflag [#allocation5], 1
    %16 = vsyncpa %s15, 0
    %17 = vsyncpa [#allocation11], 0
    loop: start=0, step=1, limit=10
    $region2: #{tpu_custom_call.1} parent=1 // loop_pre_header
      _
    $region3: #{tpu_custom_call.1} parent=1 // loop_header
      %s19 = sphi 0, %s23
      %p20 = scmp.ge.s32.totalorder %s19, 10
      %s29 = sphi 0, %s31
      %s32 = sphi 0, %s29
      %s33 = sphi 0, %s32
      %s49 = sphi 0, %s33
      %s53 = sphi 0, %s53
      %s55 = sphi 0, %s53
      %s56 = sphi 0, %s55
      %s70 = sphi 0, %s56
      %s74 = sphi 0, %s74
      %s76 = sphi 0, %s74
      %s77 = sphi 0, %s76
      %s91 = sphi 0, %s77
      %s97 = sphi 0, %s99
      %s100 = sphi 0, %s97
      %s101 = sphi 0, %s100
      %s117 = sphi 0, %s101
      %s121 = sphi 0, %s121
      %s123 = sphi 0, %s121
      %s124 = sphi 0, %s123
      %s138 = sphi 0, %s124
    $region4: #{tpu_custom_call.1} parent=1 // loop_header_branch
      %22 = sbr.rel (%p20) target = $region8
    $region5: #{tpu_custom_call.1} parent=1 // loop_body
      %s24 = ssub.s32 %s19, 1
      %s25 = ssub.s32 %s19, 2
      %s26 = sadd.s32 %s19, 1
      %s27 = ssub.s32 %s19, %s26
      %p28 = scmp.eq.s32.totalorder %s27, 0
      %s30 = sadd.s32 %s29, 1
      %s31 = scalar_select %p28, %s29, %s30
      %p34 = pneg %p28
      %p35 = scmp.eq.s32.totalorder %s19, 7
      %p36 = por %p34, %p35
      %p37 = scmp.ne.s32.totalorder %s29, %s32
      %p38 = scmp.eq.s32.totalorder %s19, 0
      %p39 = por %p37, %p38
      %p40 = scmp.ne.s32.totalorder %s29, %s32
      %p41 = scmp.eq.s32.totalorder %s24, 7
      %p42 = por %p40, %p41
      %p43 = scmp.ne.s32.totalorder %s32, %s33
      %p44 = scmp.eq.s32.totalorder %s24, 0
      %p45 = por %p43, %p44
      %p46 = scmp.ne.s32.totalorder %s32, %s33
      %p47 = scmp.eq.s32.totalorder %s25, 7
      %p48 = por %p46, %p47
      %p50 = scmp.ne.s32.totalorder %s33, %s49
      %p51 = scmp.eq.s32.totalorder %s25, 0
      %p52 = por %p50, %p51
      %s54 = sadd.s32 %s53, 1
      %p57 = scmp.eq.s32.totalorder %s19, 7
      %p58 = scmp.ne.s32.totalorder %s53, %s55
      %p59 = scmp.eq.s32.totalorder %s19, 0
      %p60 = por %p58, %p59
      %p61 = scmp.ne.s32.totalorder %s53, %s55
      %p62 = scmp.eq.s32.totalorder %s24, 7
      %p63 = por %p61, %p62
      %p64 = scmp.ne.s32.totalorder %s55, %s56
      %p65 = scmp.eq.s32.totalorder %s24, 0
      %p66 = por %p64, %p65
      %p67 = scmp.ne.s32.totalorder %s55, %s56
      %p68 = scmp.eq.s32.totalorder %s25, 7
      %p69 = por %p67, %p68
      %p71 = scmp.ne.s32.totalorder %s56, %s70
      %p72 = scmp.eq.s32.totalorder %s25, 0
      %p73 = por %p71, %p72
      %s75 = sadd.s32 %s74, 1
      %p78 = scmp.eq.s32.totalorder %s19, 7
      %p79 = scmp.ne.s32.totalorder %s74, %s76
      %p80 = scmp.eq.s32.totalorder %s19, 0
      %p81 = por %p79, %p80
      %p82 = scmp.ne.s32.totalorder %s74, %s76
      %p83 = scmp.eq.s32.totalorder %s24, 7
      %p84 = por %p82, %p83
      %p85 = scmp.ne.s32.totalorder %s76, %s77
      %p86 = scmp.eq.s32.totalorder %s24, 0
      %p87 = por %p85, %p86
      %p88 = scmp.ne.s32.totalorder %s76, %s77
      %p89 = scmp.eq.s32.totalorder %s25, 7
      %p90 = por %p88, %p89
      %p92 = scmp.ne.s32.totalorder %s77, %s91
      %p93 = scmp.eq.s32.totalorder %s25, 0
      %p94 = por %p92, %p93
      %s95 = ssub.s32 %s19, %s26
      %p96 = scmp.eq.s32.totalorder %s95, 0
      %s98 = sadd.s32 %s97, 1
      %s99 = scalar_select %p96, %s97, %s98
      %p102 = pneg %p96
      %p103 = scmp.eq.s32.totalorder %s19, 7
      %p104 = por %p102, %p103
      %p105 = scmp.ne.s32.totalorder %s97, %s100
      %p106 = scmp.eq.s32.totalorder %s19, 0
      %p107 = por %p105, %p106
      %p108 = scmp.ne.s32.totalorder %s97, %s100
      %p109 = scmp.eq.s32.totalorder %s24, 7
      %p110 = por %p108, %p109
      %p111 = scmp.ne.s32.totalorder %s100, %s101
      %p112 = scmp.eq.s32.totalorder %s24, 0
      %p113 = por %p111, %p112
      %p114 = scmp.ne.s32.totalorder %s100, %s101
      %p115 = scmp.eq.s32.totalorder %s25, 7
      %p116 = por %p114, %p115
      %p118 = scmp.ne.s32.totalorder %s101, %s117
      %p119 = scmp.eq.s32.totalorder %s25, 0
      %p120 = por %p118, %p119
      %s122 = sadd.s32 %s121, 1
      %p125 = scmp.eq.s32.totalorder %s19, 7
      %p126 = scmp.ne.s32.totalorder %s121, %s123
      %p127 = scmp.eq.s32.totalorder %s19, 0
      %p128 = por %p126, %p127
      %p129 = scmp.ne.s32.totalorder %s121, %s123
      %p130 = scmp.eq.s32.totalorder %s24, 7
      %p131 = por %p129, %p130
      %p132 = scmp.ne.s32.totalorder %s123, %s124
      %p133 = scmp.eq.s32.totalorder %s24, 0
      %p134 = por %p132, %p133
      %p135 = scmp.ne.s32.totalorder %s123, %s124
      %p136 = scmp.eq.s32.totalorder %s25, 7
      %p137 = por %p135, %p136
      %p139 = scmp.ne.s32.totalorder %s124, %s138
      %p140 = scmp.eq.s32.totalorder %s25, 0
      %p141 = por %p139, %p140
      %p142 = scmp.le.s32.totalorder 1, %s19
      %p143 = scmp.lt.s32.totalorder %s19, 9
      %p144 = pnand %p142, %p143
      %p145 = pneg %p144
      // Predicated region
      $region9: #{tpu_custom_call.1} parent=5 // pred_check
        _
      $region10: #{tpu_custom_call.1} parent=5 // pred_check_branch
        %147 = sbr.rel (%p144) target = $region12
      $region11: #{tpu_custom_call.1} parent=5 // pred_region
        %s148 = ssub.s32 %s19, 1
        // Predicated region
        $region13: #{tpu_custom_call.1} parent=11 // pred_check
          %p149 = pneg %p66
        $region14: #{tpu_custom_call.1} parent=11 // pred_check_branch
          %151 = sbr.rel (%p149) target = $region16
        $region15: #{tpu_custom_call.1} parent=11 // pred_region
          %s153 = ssub.s32 512, 512
          %154 = vsyncadd [#allocation7], %s153
          %s155 = sshll.u32 [#allocation6], 4
          %s156 = int_to_ptr.vmem [resolvable:$true] %s155
          %161 = dma.hbm_to_vmem [thread:$0]  %s1, 512, %s156, [#allocation7], 128, 128, 8
        $region16: #{tpu_custom_call.1} parent=11 // pred_fallthru
          _
        // Predicated region
        $region17: #{tpu_custom_call.1} parent=11 // pred_check
          %p162 = pneg %p87
        $region18: #{tpu_custom_call.1} parent=11 // pred_check_branch
          %164 = sbr.rel (%p162) target = $region20
        $region19: #{tpu_custom_call.1} parent=11 // pred_region
          %s166 = ssub.s32 8192, 8192
          %167 = vsyncadd [#allocation7], %s166
          %s168 = sshll.u32 [#allocation8], 4
          %s169 = int_to_ptr.vmem [resolvable:$true] %s168
          %174 = dma.hbm_to_vmem [thread:$0]  %s2, 8192, %s169, [#allocation7], 256, 256, 16
        $region20: #{tpu_custom_call.1} parent=11 // pred_fallthru
          _
      $region12: #{tpu_custom_call.1} parent=5 // pred_fallthru
        _
      %p175 = scmp.lt.s32.totalorder %s19, 8
      // Predicated region
      $region21: #{tpu_custom_call.1} parent=5 // pred_check
        %p176 = pneg %p175
      $region22: #{tpu_custom_call.1} parent=5 // pred_check_branch
        %178 = sbr.rel (%p176) target = $region24
      $region23: #{tpu_custom_call.1} parent=5 // pred_region
        // Predicated region
        $region25: #{tpu_custom_call.1} parent=23 // pred_check
          %p179 = pneg %p39
        $region26: #{tpu_custom_call.1} parent=23 // pred_check_branch
          %181 = sbr.rel (%p179) target = $region28
        $region27: #{tpu_custom_call.1} parent=23 // pred_region
          %s182 = sand.u32 %s29, 1
          %s183 = scalar_lea.sflag [#allocation4], %s182
          %s184 = sand.u32 %s29, 1
          %s185 = smul.addr %s184, 4
          %s186 = scalar_lea.vmem [#allocation3], %s185
          %s188 = ssub.s32 64, 64
          %189 = vsyncadd %s183, %s188
          %s190 = smul.addr %s19, 64
          %s191 = scalar_lea.hbm %s0, %s190
          %s193 = sshll.u32 %s186, 4
          %s194 = int_to_ptr.vmem [resolvable:$true] %s193
          %196 = dma.hbm_to_vmem [thread:$0]  %s191, 64, %s194, %s183
        $region28: #{tpu_custom_call.1} parent=23 // pred_fallthru
          _
      $region24: #{tpu_custom_call.1} parent=5 // pred_fallthru
        _
      %p197 = scmp.le.s32.totalorder 1, %s19
      %p198 = scmp.lt.s32.totalorder %s19, 9
      %p199 = pnand %p197, %p198
      %p200 = pneg %p199
      // Predicated region
      $region29: #{tpu_custom_call.1} parent=5 // pred_check
        _
      $region30: #{tpu_custom_call.1} parent=5 // pred_check_branch
        %202 = sbr.rel (%p199) target = $region32
      $region31: #{tpu_custom_call.1} parent=5 // pred_region
        %s203 = ssub.s32 %s19, 1
        %s204 = sand.u32 %s32, 1
        %s205 = scalar_lea.sflag [#allocation4], %s204
        %s206 = sand.u32 %s32, 1
        %s207 = smul.addr %s206, 4
        %s208 = scalar_lea.vmem [#allocation3], %s207
        // Predicated region
        $region33: #{tpu_custom_call.1} parent=31 // pred_check
          %p209 = pneg %p45
        $region34: #{tpu_custom_call.1} parent=31 // pred_check_branch
          %211 = sbr.rel (%p209) target = $region36
        $region35: #{tpu_custom_call.1} parent=31 // pred_region
          %212 = dma.done %s205, 64
        $region36: #{tpu_custom_call.1} parent=31 // pred_fallthru
          _
        // Predicated region
        $region37: #{tpu_custom_call.1} parent=31 // pred_check
          %p213 = pneg %p66
        $region38: #{tpu_custom_call.1} parent=31 // pred_check_branch
          %215 = sbr.rel (%p213) target = $region40
        $region39: #{tpu_custom_call.1} parent=31 // pred_region
          %216 = dma.done [#allocation7], 512
        $region40: #{tpu_custom_call.1} parent=31 // pred_fallthru
          _
        // Predicated region
        $region41: #{tpu_custom_call.1} parent=31 // pred_check
          %p217 = pneg %p87
        $region42: #{tpu_custom_call.1} parent=31 // pred_check_branch
          %219 = sbr.rel (%p217) target = $region44
        $region43: #{tpu_custom_call.1} parent=31 // pred_region
          %220 = dma.done [#allocation7], 8192
        $region44: #{tpu_custom_call.1} parent=31 // pred_fallthru
          _
        %s221 = sand.u32 %s32, 1
        %s222 = scalar_lea.sflag [#allocation4], %s221
        %s223 = sand.u32 %s32, 1
        %s224 = smul.addr %s223, 4
        %s225 = scalar_lea.vmem [#allocation3], %s224
        %p226 = pneg %p45
        %p227 = pneg %p42
        %p228 = pneg %p66
        %p229 = pneg %p63
        %p230 = pneg %p87
        %p231 = pneg %p84
        %p232 = pneg %p113
        %p233 = pneg %p110
        %s234 = sand.u32 %s100, 1
        %s235 = scalar_lea.sflag [#allocation5], %s234
        %s236 = sand.u32 %s100, 1
        %s237 = smul.addr %s236, 8
        %s238 = scalar_lea.vmem [#allocation9], %s237
        %p239 = pneg %p134
        %p240 = pneg %p131
        %p241 = scmp.eq.s32.totalorder %s24, 0
        // Predicated region
        $region45: #{tpu_custom_call.1} parent=31 // pred_check
          %p242 = pneg %p241
        $region46: #{tpu_custom_call.1} parent=31 // pred_check_branch
          %244 = sbr.rel (%p242) target = $region48
        $region47: #{tpu_custom_call.1} parent=31 // pred_region
          %v245 = vld [vmem:[#allocation6] sm:$0xff]
          %v246 = vld [vmem:[#allocation6 + $0x8] sm:$0xff]
          %v247 = vld [vmem:[#allocation6 + $0x10] sm:$0xff]
          %v248 = vld [vmem:[#allocation6 + $0x18] sm:$0xff]
          %249 = vst [vmem:[#allocation2] sm:$0xff] %v245
          %250 = vst [vmem:[#allocation2 + $0x8] sm:$0xff] %v246
          %251 = vst [vmem:[#allocation2 + $0x10] sm:$0xff] %v247
          %252 = vst [vmem:[#allocation2 + $0x18] sm:$0xff] %v248
        $region48: #{tpu_custom_call.1} parent=31 // pred_fallthru
          _
        %v253 = vld [vmem:[%s208] sm:$0xf]
        %v254 = vld [vmem:[#allocation2] sm:$0xff]
        %v255 = vpack.c.bf16 %v254, %v254
        %v256 = vld [vmem:[#allocation8] sm:$0xff]
        %v257 = vld [vmem:[#allocation8 + $0x8] sm:$0xff]
        %v258 = vld [vmem:[#allocation8 + $0x10] sm:$0xff]
        %v259 = vld [vmem:[#allocation8 + $0x18] sm:$0xff]
        %v260 = vld [vmem:[#allocation8 + $0x20] sm:$0xff]
        %v261 = vld [vmem:[#allocation8 + $0x28] sm:$0xff]
        %v262 = vld [vmem:[#allocation8 + $0x30] sm:$0xff]
        %v263 = vld [vmem:[#allocation8 + $0x38] sm:$0xff]
        %v264 = vld [vmem:[#allocation8 + $0x40] sm:$0xff]
        %v265 = vld [vmem:[#allocation8 + $0x48] sm:$0xff]
        %v266 = vld [vmem:[#allocation8 + $0x50] sm:$0xff]
        %v267 = vld [vmem:[#allocation8 + $0x58] sm:$0xff]
        %v268 = vld [vmem:[#allocation8 + $0x60] sm:$0xff]
        %v269 = vld [vmem:[#allocation8 + $0x68] sm:$0xff]
        %v270 = vld [vmem:[#allocation8 + $0x70] sm:$0xff]
        %v271 = vld [vmem:[#allocation8 + $0x78] sm:$0xff]
        %v272 = vld [vmem:[#allocation8 + $0x80] sm:$0xff]
        %v273 = vld [vmem:[#allocation8 + $0x88] sm:$0xff]
        %v274 = vld [vmem:[#allocation8 + $0x90] sm:$0xff]
        %v275 = vld [vmem:[#allocation8 + $0x98] sm:$0xff]
        %v276 = vld [vmem:[#allocation8 + $0xa0] sm:$0xff]
        %v277 = vld [vmem:[#allocation8 + $0xa8] sm:$0xff]
        %v278 = vld [vmem:[#allocation8 + $0xb0] sm:$0xff]
        %v279 = vld [vmem:[#allocation8 + $0xb8] sm:$0xff]
        %v280 = vld [vmem:[#allocation8 + $0xc0] sm:$0xff]
        %v281 = vld [vmem:[#allocation8 + $0xc8] sm:$0xff]
        %v282 = vld [vmem:[#allocation8 + $0xd0] sm:$0xff]
        %v283 = vld [vmem:[#allocation8 + $0xd8] sm:$0xff]
        %v284 = vld [vmem:[#allocation8 + $0xe0] sm:$0xff]
        %v285 = vld [vmem:[#allocation8 + $0xe8] sm:$0xff]
        %v286 = vld [vmem:[#allocation8 + $0xf0] sm:$0xff]
        %v287 = vld [vmem:[#allocation8 + $0xf8] sm:$0xff]
        %v288 = vld [vmem:[#allocation8 + $0x100] sm:$0xff]
        %v289 = vld [vmem:[#allocation8 + $0x108] sm:$0xff]
        %v290 = vld [vmem:[#allocation8 + $0x110] sm:$0xff]
        %v291 = vld [vmem:[#allocation8 + $0x118] sm:$0xff]
        %v292 = vld [vmem:[#allocation8 + $0x120] sm:$0xff]
        %v293 = vld [vmem:[#allocation8 + $0x128] sm:$0xff]
        %v294 = vld [vmem:[#allocation8 + $0x130] sm:$0xff]
        %v295 = vld [vmem:[#allocation8 + $0x138] sm:$0xff]
        %v296 = vld [vmem:[#allocation8 + $0x140] sm:$0xff]
        %v297 = vld [vmem:[#allocation8 + $0x148] sm:$0xff]
        %v298 = vld [vmem:[#allocation8 + $0x150] sm:$0xff]
        %v299 = vld [vmem:[#allocation8 + $0x158] sm:$0xff]
        %v300 = vld [vmem:[#allocation8 + $0x160] sm:$0xff]
        %v301 = vld [vmem:[#allocation8 + $0x168] sm:$0xff]
        %v302 = vld [vmem:[#allocation8 + $0x170] sm:$0xff]
        %v303 = vld [vmem:[#allocation8 + $0x178] sm:$0xff]
        %v304 = vld [vmem:[#allocation8 + $0x180] sm:$0xff]
        %v305 = vld [vmem:[#allocation8 + $0x188] sm:$0xff]
        %v306 = vld [vmem:[#allocation8 + $0x190] sm:$0xff]
        %v307 = vld [vmem:[#allocation8 + $0x198] sm:$0xff]
        %v308 = vld [vmem:[#allocation8 + $0x1a0] sm:$0xff]
        %v309 = vld [vmem:[#allocation8 + $0x1a8] sm:$0xff]
        %v310 = vld [vmem:[#allocation8 + $0x1b0] sm:$0xff]
        %v311 = vld [vmem:[#allocation8 + $0x1b8] sm:$0xff]
        %v312 = vld [vmem:[#allocation8 + $0x1c0] sm:$0xff]
        %v313 = vld [vmem:[#allocation8 + $0x1c8] sm:$0xff]
        %v314 = vld [vmem:[#allocation8 + $0x1d0] sm:$0xff]
        %v315 = vld [vmem:[#allocation8 + $0x1d8] sm:$0xff]
        %v316 = vld [vmem:[#allocation8 + $0x1e0] sm:$0xff]
        %v317 = vld [vmem:[#allocation8 + $0x1e8] sm:$0xff]
        %v318 = vld [vmem:[#allocation8 + $0x1f0] sm:$0xff]
        %v319 = vld [vmem:[#allocation8 + $0x1f8] sm:$0xff]
        %v384 = vunpack.c.l.b16 %v256
        %v385 = vunpack.c.h.b16 %v256
        %v386 = vunpack.c.l.b16 %v257
        %v387 = vunpack.c.h.b16 %v257
        %v388 = vunpack.c.l.b16 %v258
        %v389 = vunpack.c.h.b16 %v258
        %v390 = vunpack.c.l.b16 %v259
        %v391 = vunpack.c.h.b16 %v259
        %v392 = vunpack.c.l.b16 %v260
        %v393 = vunpack.c.h.b16 %v260
        %v394 = vunpack.c.l.b16 %v261
        %v395 = vunpack.c.h.b16 %v261
        %v396 = vunpack.c.l.b16 %v262
        %v397 = vunpack.c.h.b16 %v262
        %v398 = vunpack.c.l.b16 %v263
        %v399 = vunpack.c.h.b16 %v263
        %v400 = vunpack.c.l.b16 %v264
        %v401 = vunpack.c.h.b16 %v264
        %v402 = vunpack.c.l.b16 %v265
        %v403 = vunpack.c.h.b16 %v265
        %v404 = vunpack.c.l.b16 %v266
        %v405 = vunpack.c.h.b16 %v266
        %v406 = vunpack.c.l.b16 %v267
        %v407 = vunpack.c.h.b16 %v267
        %v408 = vunpack.c.l.b16 %v268
        %v409 = vunpack.c.h.b16 %v268
        %v410 = vunpack.c.l.b16 %v269
        %v411 = vunpack.c.h.b16 %v269
        %v412 = vunpack.c.l.b16 %v270
        %v413 = vunpack.c.h.b16 %v270
        %v414 = vunpack.c.l.b16 %v271
        %v415 = vunpack.c.h.b16 %v271
        %v416 = vunpack.c.l.b16 %v272
        %v417 = vunpack.c.h.b16 %v272
        %v418 = vunpack.c.l.b16 %v273
        %v419 = vunpack.c.h.b16 %v273
        %v420 = vunpack.c.l.b16 %v274
        %v421 = vunpack.c.h.b16 %v274
        %v422 = vunpack.c.l.b16 %v275
        %v423 = vunpack.c.h.b16 %v275
        %v424 = vunpack.c.l.b16 %v276
        %v425 = vunpack.c.h.b16 %v276
        %v426 = vunpack.c.l.b16 %v277
        %v427 = vunpack.c.h.b16 %v277
        %v428 = vunpack.c.l.b16 %v278
        %v429 = vunpack.c.h.b16 %v278
        %v430 = vunpack.c.l.b16 %v279
        %v431 = vunpack.c.h.b16 %v279
        %v432 = vunpack.c.l.b16 %v280
        %v433 = vunpack.c.h.b16 %v280
        %v434 = vunpack.c.l.b16 %v281
        %v435 = vunpack.c.h.b16 %v281
        %v436 = vunpack.c.l.b16 %v282
        %v437 = vunpack.c.h.b16 %v282
        %v438 = vunpack.c.l.b16 %v283
        %v439 = vunpack.c.h.b16 %v283
        %v440 = vunpack.c.l.b16 %v284
        %v441 = vunpack.c.h.b16 %v284
        %v442 = vunpack.c.l.b16 %v285
        %v443 = vunpack.c.h.b16 %v285
        %v444 = vunpack.c.l.b16 %v286
        %v445 = vunpack.c.h.b16 %v286
        %v446 = vunpack.c.l.b16 %v287
        %v447 = vunpack.c.h.b16 %v287
        %v448 = vunpack.c.l.b16 %v288
        %v449 = vunpack.c.h.b16 %v288
        %v450 = vunpack.c.l.b16 %v289
        %v451 = vunpack.c.h.b16 %v289
        %v452 = vunpack.c.l.b16 %v290
        %v453 = vunpack.c.h.b16 %v290
        %v454 = vunpack.c.l.b16 %v291
        %v455 = vunpack.c.h.b16 %v291
        %v456 = vunpack.c.l.b16 %v292
        %v457 = vunpack.c.h.b16 %v292
        %v458 = vunpack.c.l.b16 %v293
        %v459 = vunpack.c.h.b16 %v293
        %v460 = vunpack.c.l.b16 %v294
        %v461 = vunpack.c.h.b16 %v294
        %v462 = vunpack.c.l.b16 %v295
        %v463 = vunpack.c.h.b16 %v295
        %v464 = vunpack.c.l.b16 %v296
        %v465 = vunpack.c.h.b16 %v296
        %v466 = vunpack.c.l.b16 %v297
        %v467 = vunpack.c.h.b16 %v297
        %v468 = vunpack.c.l.b16 %v298
        %v469 = vunpack.c.h.b16 %v298
        %v470 = vunpack.c.l.b16 %v299
        %v471 = vunpack.c.h.b16 %v299
        %v472 = vunpack.c.l.b16 %v300
        %v473 = vunpack.c.h.b16 %v300
        %v474 = vunpack.c.l.b16 %v301
        %v475 = vunpack.c.h.b16 %v301
        %v476 = vunpack.c.l.b16 %v302
        %v477 = vunpack.c.h.b16 %v302
        %v478 = vunpack.c.l.b16 %v303
        %v479 = vunpack.c.h.b16 %v303
        %v480 = vunpack.c.l.b16 %v304
        %v481 = vunpack.c.h.b16 %v304
        %v482 = vunpack.c.l.b16 %v305
        %v483 = vunpack.c.h.b16 %v305
        %v484 = vunpack.c.l.b16 %v306
        %v485 = vunpack.c.h.b16 %v306
        %v486 = vunpack.c.l.b16 %v307
        %v487 = vunpack.c.h.b16 %v307
        %v488 = vunpack.c.l.b16 %v308
        %v489 = vunpack.c.h.b16 %v308
        %v490 = vunpack.c.l.b16 %v309
        %v491 = vunpack.c.h.b16 %v309
        %v492 = vunpack.c.l.b16 %v310
        %v493 = vunpack.c.h.b16 %v310
        %v494 = vunpack.c.l.b16 %v311
        %v495 = vunpack.c.h.b16 %v311
        %v496 = vunpack.c.l.b16 %v312
        %v497 = vunpack.c.h.b16 %v312
        %v498 = vunpack.c.l.b16 %v313
        %v499 = vunpack.c.h.b16 %v313
        %v500 = vunpack.c.l.b16 %v314
        %v501 = vunpack.c.h.b16 %v314
        %v502 = vunpack.c.l.b16 %v315
        %v503 = vunpack.c.h.b16 %v315
        %v504 = vunpack.c.l.b16 %v316
        %v505 = vunpack.c.h.b16 %v316
        %v506 = vunpack.c.l.b16 %v317
        %v507 = vunpack.c.h.b16 %v317
        %v508 = vunpack.c.l.b16 %v318
        %v509 = vunpack.c.h.b16 %v318
        %v510 = vunpack.c.l.b16 %v319
        %v511 = vunpack.c.h.b16 %v319
        %v512 = vpack.c.b16 %v388, %v384
        %v513 = vpack.c.b16 %v389, %v385
        %v514 = vpack.c.b16 %v390, %v386
        %v515 = vpack.c.b16 %v391, %v387
        %v516 = vpack.c.b16 %v396, %v392
        %v517 = vpack.c.b16 %v397, %v393
        %v518 = vpack.c.b16 %v398, %v394
        %v519 = vpack.c.b16 %v399, %v395
        %v520 = vpack.c.b16 %v404, %v400
        %v521 = vpack.c.b16 %v405, %v401
        %v522 = vpack.c.b16 %v406, %v402
        %v523 = vpack.c.b16 %v407, %v403
        %v524 = vpack.c.b16 %v412, %v408
        %v525 = vpack.c.b16 %v413, %v409
        %v526 = vpack.c.b16 %v414, %v410
        %v527 = vpack.c.b16 %v415, %v411
        %v528 = vpack.c.b16 %v420, %v416
        %v529 = vpack.c.b16 %v421, %v417
        %v530 = vpack.c.b16 %v422, %v418
        %v531 = vpack.c.b16 %v423, %v419
        %v532 = vpack.c.b16 %v428, %v424
        %v533 = vpack.c.b16 %v429, %v425
        %v534 = vpack.c.b16 %v430, %v426
        %v535 = vpack.c.b16 %v431, %v427
        %v536 = vpack.c.b16 %v436, %v432
        %v537 = vpack.c.b16 %v437, %v433
        %v538 = vpack.c.b16 %v438, %v434
        %v539 = vpack.c.b16 %v439, %v435
        %v540 = vpack.c.b16 %v444, %v440
        %v541 = vpack.c.b16 %v445, %v441
        %v542 = vpack.c.b16 %v446, %v442
        %v543 = vpack.c.b16 %v447, %v443
        %v544 = vpack.c.b16 %v452, %v448
        %v545 = vpack.c.b16 %v453, %v449
        %v546 = vpack.c.b16 %v454, %v450
        %v547 = vpack.c.b16 %v455, %v451
        %v548 = vpack.c.b16 %v460, %v456
        %v549 = vpack.c.b16 %v461, %v457
        %v550 = vpack.c.b16 %v462, %v458
        %v551 = vpack.c.b16 %v463, %v459
        %v552 = vpack.c.b16 %v468, %v464
        %v553 = vpack.c.b16 %v469, %v465
        %v554 = vpack.c.b16 %v470, %v466
        %v555 = vpack.c.b16 %v471, %v467
        %v556 = vpack.c.b16 %v476, %v472
        %v557 = vpack.c.b16 %v477, %v473
        %v558 = vpack.c.b16 %v478, %v474
        %v559 = vpack.c.b16 %v479, %v475
        %v560 = vpack.c.b16 %v484, %v480
        %v561 = vpack.c.b16 %v485, %v481
        %v562 = vpack.c.b16 %v486, %v482
        %v563 = vpack.c.b16 %v487, %v483
        %v564 = vpack.c.b16 %v492, %v488
        %v565 = vpack.c.b16 %v493, %v489
        %v566 = vpack.c.b16 %v494, %v490
        %v567 = vpack.c.b16 %v495, %v491
        %v568 = vpack.c.b16 %v500, %v496
        %v569 = vpack.c.b16 %v501, %v497
        %v570 = vpack.c.b16 %v502, %v498
        %v571 = vpack.c.b16 %v503, %v499
        %v572 = vpack.c.b16 %v508, %v504
        %v573 = vpack.c.b16 %v509, %v505
        %v574 = vpack.c.b16 %v510, %v506
        %v575 = vpack.c.b16 %v511, %v507
        %640 = vmatprep.subr.bf16.mxu0 %v513
        %641 = vmatpush1.bf16.msra.mxu0 %v512
        %642 = vmatprep.subr.bf16.mxu0 %v517
        %643 = vmatpush1.bf16.msra.mxu0 %v516
        %644 = vmatprep.subr.bf16.mxu0 %v521
        %645 = vmatpush1.bf16.msra.mxu0 %v520
        %646 = vmatprep.subr.bf16.mxu0 %v525
        %647 = vmatpush1.bf16.msra.mxu0 %v524
        %648 = vmatprep.subr.bf16.mxu0 %v529
        %649 = vmatpush1.bf16.msra.mxu0 %v528
        %650 = vmatprep.subr.bf16.mxu0 %v533
        %651 = vmatpush1.bf16.msra.mxu0 %v532
        %652 = vmatprep.subr.bf16.mxu0 %v537
        %653 = vmatpush1.bf16.msra.mxu0 %v536
        %654 = vmatprep.subr.bf16.mxu0 %v541
        %655 = vmatpush1.bf16.msra.mxu0 %v540
        %656 = vmatprep.subr.bf16.mxu0 %v545
        %657 = vmatpush1.bf16.msra.mxu0 %v544
        %658 = vmatprep.subr.bf16.mxu0 %v549
        %659 = vmatpush1.bf16.msra.mxu0 %v548
        %660 = vmatprep.subr.bf16.mxu0 %v553
        %661 = vmatpush1.bf16.msra.mxu0 %v552
        %662 = vmatprep.subr.bf16.mxu0 %v557
        %663 = vmatpush1.bf16.msra.mxu0 %v556
        %664 = vmatprep.subr.bf16.mxu0 %v561
        %665 = vmatpush1.bf16.msra.mxu0 %v560
        %666 = vmatprep.subr.bf16.mxu0 %v565
        %667 = vmatpush1.bf16.msra.mxu0 %v564
        %668 = vmatprep.subr.bf16.mxu0 %v569
        %669 = vmatpush1.bf16.msra.mxu0 %v568
        %670 = vmatprep.subr.bf16.mxu0 %v573
        %671 = vmatpush1.bf16.msra.mxu0 %v572
        %672 = vmatprep.mubr.bf16.mxu0 %v255
        %673 = vmatmul.mubr.bf16.gmra.mrb[0].mxu0 %v253
        %v674 = vpop.f32.mrb[0].mxu0
        %v675 = vadd.f32 0.0, %v674
        %v676 = vpop.f32.mrb[0].mxu0
        %v677 = vadd.f32 0.0, %v676
        %v678 = vpop.f32.mrb[0].mxu0
        %v679 = vpop.f32.mrb[0].mxu0
        %680 = vdwg.mxu0
        %681 = vmatprep.subr.bf16.mxu0 %v515
        %682 = vmatpush1.bf16.msra.mxu0 %v514
        %683 = vmatprep.subr.bf16.mxu0 %v519
        %684 = vmatpush1.bf16.msra.mxu0 %v518
        %685 = vmatprep.subr.bf16.mxu0 %v523
        %686 = vmatpush1.bf16.msra.mxu0 %v522
        %687 = vmatprep.subr.bf16.mxu0 %v527
        %688 = vmatpush1.bf16.msra.mxu0 %v526
        %689 = vmatprep.subr.bf16.mxu0 %v531
        %690 = vmatpush1.bf16.msra.mxu0 %v530
        %691 = vmatprep.subr.bf16.mxu0 %v535
        %692 = vmatpush1.bf16.msra.mxu0 %v534
        %693 = vmatprep.subr.bf16.mxu0 %v539
        %694 = vmatpush1.bf16.msra.mxu0 %v538
        %695 = vmatprep.subr.bf16.mxu0 %v543
        %696 = vmatpush1.bf16.msra.mxu0 %v542
        %697 = vmatprep.subr.bf16.mxu0 %v547
        %698 = vmatpush1.bf16.msra.mxu0 %v546
        %699 = vmatprep.subr.bf16.mxu0 %v551
        %700 = vmatpush1.bf16.msra.mxu0 %v550
        %701 = vmatprep.subr.bf16.mxu0 %v555
        %702 = vmatpush1.bf16.msra.mxu0 %v554
        %703 = vmatprep.subr.bf16.mxu0 %v559
        %704 = vmatpush1.bf16.msra.mxu0 %v558
        %705 = vmatprep.subr.bf16.mxu0 %v563
        %706 = vmatpush1.bf16.msra.mxu0 %v562
        %707 = vmatprep.subr.bf16.mxu0 %v567
        %708 = vmatpush1.bf16.msra.mxu0 %v566
        %709 = vmatprep.subr.bf16.mxu0 %v571
        %710 = vmatpush1.bf16.msra.mxu0 %v570
        %711 = vmatprep.subr.bf16.mxu0 %v575
        %712 = vmatpush1.bf16.msra.mxu0 %v574
        %713 = vmatprep.mubr.bf16.mxu0 %v255
        %714 = vmatmul.mubr.bf16.gmra.mrb[0].mxu0 %v253
        %v715 = vpop.f32.mrb[0].mxu0
        %v716 = vadd.f32 0.0, %v715
        %v717 = vpop.f32.mrb[0].mxu0
        %v718 = vadd.f32 0.0, %v717
        %v719 = vpop.f32.mrb[0].mxu0
        %v720 = vpop.f32.mrb[0].mxu0
        %721 = vdwg.mxu0
        %s722 = scalar_lea.vmem [#allocation2], 8
        %v723 = vld [vmem:[%s722] sm:$0xff]
        %s724 = scalar_lea.vmem [#allocation2], 16
        %v725 = vld [vmem:[%s724] sm:$0xff]
        %s726 = scalar_lea.vmem [#allocation2], 24
        %v727 = vld [vmem:[%s726] sm:$0xff]
        %v728 = vadd.f32 %v677, %v727
        %v729 = vmax.f32 %v728, %v675
        %v730 = vsub.f32 %v675, %v729
        %v731 = vmul.f32 %v730, 1.442695
        %v732 = vpow.pop %v731
        %v733 = vsub.f32 %v728, %v729
        %v734 = vmul.f32 %v733, 1.442695
        %v735 = vpow.pop %v734
        %v736 = vtanh.pop %v716
        %v737 = vxor.u32 %v718, 2147483648
        %v738 = vmul.f32 %v737, 1.442695
        %v739 = vpow.pop %v738
        %v740 = vadd.f32 %v739, 1.0
        %v741 = vrcp.pop %v740
        %v742 = vmul.f32 1.0, %v741
        %v743 = vmul.f32 %v735, %v723
        %v744 = vmul.f32 %v732, %v736
        %v745 = vadd.f32 %v743, %v744
        %v746 = vmul.f32 %v735, %v725
        %v747 = vadd.f32 %v746, %v732
        %v748 = vrcp.pop %v747
        %v749 = vmul.f32 %v747, %v748
        %v750 = vsub.f32 2.0, %v749
        %v751 = vmul.f32 %v748, %v750
        %v752 = vmul.f32 %v745, %v751
        %v753 = vmul.f32 %v742, %v752
        %754 = vst [vmem:[#allocation2] sm:$0xff] %v753
        %755 = vst [vmem:[%s722] sm:$0xff] %v745
        %756 = vst [vmem:[%s724] sm:$0xff] %v747
        %757 = vst [vmem:[%s726] sm:$0xff] %v729
        %758 = vst [vmem:[%s238] sm:$0xff] %v753
        %p759 = scmp.eq.s32.totalorder %s24, 7
        // Predicated region
        $region49: #{tpu_custom_call.1} parent=31 // pred_check
          %p760 = pneg %p759
        $region50: #{tpu_custom_call.1} parent=31 // pred_check_branch
          %762 = sbr.rel (%p760) target = $region52
        $region51: #{tpu_custom_call.1} parent=31 // pred_region
          %v763 = vld [vmem:[#allocation2] sm:$0xff]
          %v764 = vld [vmem:[#allocation2 + $0x8] sm:$0xff]
          %v765 = vld [vmem:[#allocation2 + $0x10] sm:$0xff]
          %v766 = vld [vmem:[#allocation2 + $0x18] sm:$0xff]
          %767 = vst [vmem:[#allocation10] sm:$0xff] %v763
          %768 = vst [vmem:[#allocation10 + $0x8] sm:$0xff] %v764
          %769 = vst [vmem:[#allocation10 + $0x10] sm:$0xff] %v765
          %770 = vst [vmem:[#allocation10 + $0x18] sm:$0xff] %v766
        $region52: #{tpu_custom_call.1} parent=31 // pred_fallthru
          _
        %s771 = sand.u32 %s100, 1
        %s772 = scalar_lea.sflag [#allocation5], %s771
        %s773 = sand.u32 %s100, 1
        %s774 = smul.addr %s773, 8
        %s775 = scalar_lea.vmem [#allocation9], %s774
        // Predicated region
        $region53: #{tpu_custom_call.1} parent=31 // pred_check
          %p776 = pneg %p110
        $region54: #{tpu_custom_call.1} parent=31 // pred_check_branch
          %778 = sbr.rel (%p776) target = $region56
        $region55: #{tpu_custom_call.1} parent=31 // pred_region
          %s780 = ssub.s32 128, 128
          %781 = vsyncadd %s772, %s780
          %s782 = smul.addr %s24, 128
          %s783 = scalar_lea.hbm %s3, %s782
          %s785 = sshll.u32 %s775, 4
          %s786 = int_to_ptr.vmem [resolvable:$true] %s785
          %788 = dma.vmem_to_hbm [thread:$0]  %s786, 128, %s783, %s772
        $region56: #{tpu_custom_call.1} parent=31 // pred_fallthru
          _
        // Predicated region
        $region57: #{tpu_custom_call.1} parent=31 // pred_check
          %p789 = pneg %p131
        $region58: #{tpu_custom_call.1} parent=31 // pred_check_branch
          %791 = sbr.rel (%p789) target = $region60
        $region59: #{tpu_custom_call.1} parent=31 // pred_region
          %s793 = ssub.s32 512, 512
          %794 = vsyncadd [#allocation11], %s793
          %s795 = sshll.u32 [#allocation10], 4
          %s796 = int_to_ptr.vmem [resolvable:$true] %s795
          %801 = dma.vmem_to_hbm [thread:$0]  %s796, 512, %s4, [#allocation11], 128, 128, 8
        $region60: #{tpu_custom_call.1} parent=31 // pred_fallthru
          _
        // Predicated region
        $region61: #{tpu_custom_call.1} parent=31 // pred_check
          %p802 = pneg %p131
        $region62: #{tpu_custom_call.1} parent=31 // pred_check_branch
          %804 = sbr.rel (%p802) target = $region64
        $region63: #{tpu_custom_call.1} parent=31 // pred_region
          %805 = dma.done [#allocation11], 512
        $region64: #{tpu_custom_call.1} parent=31 // pred_fallthru
          _
      $region32: #{tpu_custom_call.1} parent=5 // pred_fallthru
        _
      %p806 = scmp.le.s32.totalorder 2, %s19
      // Predicated region
      $region65: #{tpu_custom_call.1} parent=5 // pred_check
        %p807 = pneg %p806
      $region66: #{tpu_custom_call.1} parent=5 // pred_check_branch
        %809 = sbr.rel (%p807) target = $region68
      $region67: #{tpu_custom_call.1} parent=5 // pred_region
        %s810 = ssub.s32 %s19, 2
        // Predicated region
        $region69: #{tpu_custom_call.1} parent=67 // pred_check
          %p811 = pneg %p116
        $region70: #{tpu_custom_call.1} parent=67 // pred_check_branch
          %813 = sbr.rel (%p811) target = $region72
        $region71: #{tpu_custom_call.1} parent=67 // pred_region
          %s814 = sand.u32 %s101, 1
          %s815 = scalar_lea.sflag [#allocation5], %s814
          %s816 = sand.u32 %s101, 1
          %s817 = smul.addr %s816, 8
          %s818 = scalar_lea.vmem [#allocation9], %s817
          %819 = dma.done %s815, 128
        $region72: #{tpu_custom_call.1} parent=67 // pred_fallthru
          _
      $region68: #{tpu_custom_call.1} parent=5 // pred_fallthru
        _
    $region6: #{tpu_custom_call.1} parent=1 // loop_footer
      %s23 = sadd.s32 1, %s19
    $region7: #{tpu_custom_call.1} parent=1 // loop_footer_branch
      %18 = sbr.rel target = $region3
    $region8: #{tpu_custom_call.1} parent=1 // loop_exit
      _
    %820 = vsyncpa [#allocation4], 1
    %s821 = scalar_lea.sflag [#allocation4], 1
    %822 = vsyncpa %s821, 1
    %823 = vsyncpa [#allocation7], 1
    %824 = vsyncpa [#allocation5], 1
    %s825 = scalar_lea.sflag [#allocation5], 1
    %826 = vsyncpa %s825, 1
    %827 = vsyncpa [#allocation11], 1

</llo_original>
